<compile_context>
chip_gen: v5e
topology: v5e:2x2
jax: 0.10.0
libtpu: 0.0.40
codegen_flags: <defaults>
</compile_context>

<pallas_src>
import jax
import jax.numpy as jnp
from jax import lax
from jax.experimental import pallas as pl
from jax.experimental.pallas import tpu as pltpu


# ----------------------------- Pallas kernel --------------------------------


def _feature_extractor_kernel(x_ref, w1_ref, w2_ref, w3_ref, b_ref, o_ref):
    # x_ref: (Bb, L, E) bf16; w1: (3, E, Hp) bf16; w2/w3: (3, Hp, Hp) bf16;
    # b_ref: (3, Hp) f32; o_ref: (Bb, L, Hp) f32.  Hp is the lane-padded hidden dim.
    Bb, L, E = x_ref.shape
    Hp = o_ref.shape[-1]
    M = Bb * L

    # Per-sequence boundary masks, hoisted once and shared by all three conv layers.
    pos = lax.broadcasted_iota(jnp.int32, (Bb, L, 1), 1)
    not_first = pos != 0
    not_last = pos != (L - 1)

    def block(h, w_ref, bias):
        # h: (Bb, L, C) f32.  Depthwise(3-tap) + pointwise + BatchNorm folded into
        # three accumulating MXU matmuls (one per tap), then bias + ReLU.
        c = h.shape[-1]
        # 3-tap neighborhood with zero padding at sequence boundaries; roll wraps
        # within the sequence, masks zero the wrapped element (non-negative shifts).
        h_prev = jnp.where(not_first, pltpu.roll(h, shift=1, axis=1), 0.0)
        h_next = jnp.where(not_last, pltpu.roll(h, shift=L - 1, axis=1), 0.0)
        y = jnp.dot(h_prev.reshape(M, c).astype(jnp.bfloat16), w_ref[0],
                    preferred_element_type=jnp.float32)
        y = y + jnp.dot(h.reshape(M, c).astype(jnp.bfloat16), w_ref[1],
                        preferred_element_type=jnp.float32)
        y = y + jnp.dot(h_next.reshape(M, c).astype(jnp.bfloat16), w_ref[2],
                        preferred_element_type=jnp.float32)
        y = jnp.maximum(y + bias, 0.0)                      # (M, Hp) f32
        return y.reshape(Bb, L, Hp)

    x0 = x_ref[...].astype(jnp.float32)
    x1 = block(x0, w1_ref, b_ref[0:1, :])
    x2 = block(x1, w2_ref, b_ref[1:2, :])
    x3 = block(x1 + x2, w3_ref, b_ref[2:3, :])

    o_ref[...] = x3.astype(o_ref.dtype)                     # lane-dense (Hp = 128k)


def feature_extractor_pallas(x, params, *, block_b=None):
    """x: (B, L, E) float32.  Returns (B, L, H) float32 (H = true hidden_dim)."""
    B, L, E = x.shape
    w1, w2, w3, bias = params["w1"], params["w2"], params["w3"], params["bias"]
    H = params["hidden_dim"]
    Hp = bias.shape[-1]

    if block_b is None:
        # Target ~1024 rows of M per grid step (MXU M-tile is 128/256; measured Pallas
        # tilings only approach roofline at >=512-row blocks), capped by a ~16 MiB
        # per-step VMEM budget (headroom on v7x's 64 MiB VMEM).
        TARGET_ROWS = 1024
        bytes_per_row = (2 * 2 * E            # bf16 input block, double-buffered
                         + 2 * 4 * Hp         # f32 output block, double-buffered
                         + 3 * 4 * Hp         # f32 x1/x2/x3 intermediates
                         + 3 * 2 * max(E, Hp))  # bf16 tap temporaries
        max_rows = max(L, (16 << 20) // max(1, bytes_per_row))
        rows = min(TARGET_ROWS, max_rows)
        block_b = max(1, min(B, rows // L))
        while B % block_b:
            block_b -= 1
        # Megacore (v7x has 2 TensorCores): prefer an even number of grid steps, but
        # only when each step still carries >= 256 rows; otherwise one big step beats
        # paying the ~0.35 us per-step overhead twice.
        steps = B // block_b
        if steps % 2 == 1:
            for cand in range(block_b, 0, -1):
                if B % cand == 0 and (B // cand) % 2 == 0 and cand * L >= 256:
                    block_b = cand
                    break
    grid = (B // block_b,)

    def rep_spec(shape):
        # Whole parameter slab resident in VMEM, same block every grid step.
        return pl.BlockSpec(shape, lambda b, _s=shape: tuple(0 for _ in _s))

    fn = pl.pallas_call(
        _feature_extractor_kernel,
        out_shape=jax.ShapeDtypeStruct((B, L, Hp), jnp.float32),
        grid_spec=pltpu.PrefetchScalarGridSpec(
            num_scalar_prefetch=0,
            grid=grid,
            in_specs=[
                pl.BlockSpec((block_b, L, E), lambda b: (b, 0, 0)),
                rep_spec(w1.shape),
                rep_spec(w2.shape),
                rep_spec(w3.shape),
                rep_spec(bias.shape),
            ],
            out_specs=pl.BlockSpec((block_b, L, Hp), lambda b: (b, 0, 0)),
        ),
        compiler_params=pltpu.CompilerParams(
            dimension_semantics=("parallel",),
            vmem_limit_bytes=64 * 1024 * 1024,
        ),
    )
    out = fn(x.astype(jnp.bfloat16), w1, w2, w3, bias)
    return out[:, :, :H]


# --------------------------- parameter construction -------------------------


def make_raw_params(key, embedding_dim, hidden_dim=64):
    """Deterministic synthetic parameters in PyTorch-equivalent (unfused) form."""
    raw = []
    cins = [embedding_dim, hidden_dim, hidden_dim]
    for i, cin in enumerate(cins):
        cout = hidden_dim
        ks = jax.random.split(jax.random.fold_in(key, i), 8)
        raw.append(dict(
            dw_w=jax.random.normal(ks[0], (cin, 3), jnp.float32) * 0.3,     # (C,1,3)->(C,3)
            dw_b=jax.random.normal(ks[1], (cin,), jnp.float32) * 0.1,
            pw_w=jax.random.normal(ks[2], (cout, cin), jnp.float32) * (cin ** -0.5),
            pw_b=jax.random.normal(ks[3], (cout,), jnp.float32) * 0.1,
            gamma=1.0 + 0.2 * jax.random.normal(ks[4], (cout,), jnp.float32),
            beta=0.1 * jax.random.normal(ks[5], (cout,), jnp.float32),
            r_mean=0.1 * jax.random.normal(ks[6], (cout,), jnp.float32),
            r_var=jax.random.uniform(ks[7], (cout,), jnp.float32, minval=0.5, maxval=1.5),
        ))
    return raw


def fold_params(raw, eps=1e-5):
    """Fold depthwise + pointwise + BatchNorm of each block into per-tap (Cin,Hp) bf16
    weights (stacked as (3,Cin,Hp)) and an f32 bias; the hidden dim is zero-padded to a
    multiple of 128 so all kernel stores are lane-dense.  Biases stacked into (3,Hp)."""
    cout = raw[0]["pw_w"].shape[0]
    h_pad = max(128, ((cout + 127) // 128) * 128)
    ws, bs = [], []
    for i, p in enumerate(raw):
        dw_w, dw_b = p["dw_w"], p["dw_b"]          # (Cin, 3), (Cin,)
        pw_w, pw_b = p["pw_w"], p["pw_b"]          # (Cout, Cin), (Cout,)
        s = p["gamma"] / jnp.sqrt(p["r_var"] + eps)
        t = p["beta"] - p["r_mean"] * s
        co, cin = pw_w.shape
        # Per-tap folded weight: w[k][c, d] = dw_w[c, k] * pw_w[d, c] * s[d]
        # tap order [x[l-1] | x[l] | x[l+1]] matches the kernel's [h_prev | h | h_next].
        w = jnp.stack([pw_w.T * dw_w[:, k:k + 1] for k in range(3)], axis=0)  # (3,Cin,Cout)
        w = w * s[None, None, :]
        b = (pw_w @ dw_b + pw_b) * s + t            # dw/pw bias + BN shift folded in
        # Pad output channels to h_pad; blocks 2/3 also pad input-channel rows (those
        # activation channels are identically zero, so zero rows keep correctness).
        cin_pad = cin if i == 0 else h_pad
        w_full = jnp.zeros((3, cin_pad, h_pad), jnp.float32).at[:, :cin, :co].set(w)
        b_full = jnp.zeros((h_pad,), jnp.float32).at[:co].set(b)
        ws.append(w_full.astype(jnp.bfloat16))
        bs.append(b_full)
    return {"w1": ws[0], "w2": ws[1], "w3": ws[2],
            "bias": jnp.stack(bs, axis=0), "hidden_dim": cout}


# ------------------------------ pure-JAX reference ---------------------------


def feature_extractor_ref(x, raw, eps=1e-5):
    """Independent channels-last f32 reference from the unfused parameters."""

    def dwconv(h, w, b):  # h (B,L,C), w (C,3), b (C,)
        hp = jnp.pad(h, ((0, 0), (1, 1), (0, 0)))
        return hp[:, :-2] * w[:, 0] + hp[:, 1:-1] * w[:, 1] + hp[:, 2:] * w[:, 2] + b

    def block(h, p):
        h = dwconv(h, p["dw_w"], p["dw_b"])
        h = jnp.einsum("blc,dc->bld", h, p["pw_w"]) + p["pw_b"]
        s = p["gamma"] / jnp.sqrt(p["r_var"] + eps)
        t = p["beta"] - p["r_mean"] * s
        return jnp.maximum(h * s + t, 0.0)

    x1 = block(x, raw[0])
    x2 = block(x1, raw[1])
    x3 = block(x1 + x2, raw[2])
    return x3


# ------------------------------------ main -----------------------------------

if __name__ == "__main__":
    B, L, E, H = 2, 16, 32, 64  # batch, seq, embedding_dim, hidden_dim

    key = jax.random.PRNGKey(0)
    kx, kp = jax.random.split(key)
    x = jax.random.normal(kx, (B, L, E), jnp.float32)

    raw = make_raw_params(kp, embedding_dim=E, hidden_dim=H)
    params = fold_params(raw)

    out = feature_extractor_pallas(x, params)
    out = jax.block_until_ready(out)

    ref = feature_extractor_ref(x, raw)
    assert out.shape == (B, L, H), out.shape
    err = float(jnp.max(jnp.abs(out - ref)))
    # bf16 matmul inputs (f32 accumulation) -> tolerance relaxed vs pure-f32.
    assert err < 5e-2, f"max abs err {err}"
    print("KERNEL_OK")
</pallas_src>

<mosaic_0001>
module attributes {stable_mosaic.version = 11 : i64} {
  func.func @_feature_extractor_kernel(%arg0: i32, %arg1: memref<2x16x32xbf16, #tpu.memory_space<vmem>>, %arg2: memref<3x32x128xbf16, #tpu.memory_space<vmem>>, %arg3: memref<3x128x128xbf16, #tpu.memory_space<vmem>>, %arg4: memref<3x128x128xbf16, #tpu.memory_space<vmem>>, %arg5: memref<3x128xf32, #tpu.memory_space<vmem>>, %arg6: memref<2x16x128xf32, #tpu.memory_space<vmem>>) attributes {dimension_semantics = [#tpu.dimension_semantics<parallel>], iteration_bounds = array<i64: 1>, scalar_prefetch = 0 : i64, scratch_operands = 0 : i64, tpu.core_type = #tpu.core_type<tc>, window_params = [{transform_indices = @transform_0, window_bounds = array<i64: 2, 16, 32>}, {pipeline_mode = #tpu.pipeline_mode<synchronous>, transform_indices = @transform_1, window_bounds = array<i64: 3, 32, 128>}, {pipeline_mode = #tpu.pipeline_mode<synchronous>, transform_indices = @transform_2, window_bounds = array<i64: 3, 128, 128>}, {pipeline_mode = #tpu.pipeline_mode<synchronous>, transform_indices = @transform_3, window_bounds = array<i64: 3, 128, 128>}, {pipeline_mode = #tpu.pipeline_mode<synchronous>, transform_indices = @transform_4, window_bounds = array<i64: 3, 128>}, {transform_indices = @transform_5, window_bounds = array<i64: 2, 16, 128>}]} {
    %0 = tpu.iota {dimensions = array<i32: 1>} : vector<2x16x1xi32>
    %c0_i32 = arith.constant 0 : i32
    %1 = vector.broadcast %c0_i32 : i32 to vector<2x16x1xi32>
    %2 = arith.cmpi ne, %0, %1 : vector<2x16x1xi32>
    %c15_i32 = arith.constant 15 : i32
    %3 = vector.broadcast %c15_i32 : i32 to vector<2x16x1xi32>
    %4 = arith.cmpi ne, %0, %3 : vector<2x16x1xi32>
    %c0 = arith.constant 0 : index
    %c0_0 = arith.constant 0 : index
    %c0_1 = arith.constant 0 : index
    %5 = vector.load %arg1[%c0, %c0_0, %c0_1] : memref<2x16x32xbf16, #tpu.memory_space<vmem>>, vector<2x16x32xbf16>
    %6 = arith.extf %5 : vector<2x16x32xbf16> to vector<2x16x32xf32>
    %c0_2 = arith.constant 0 : index
    %c0_3 = arith.constant 0 : index
    %7 = vector.load %arg5[%c0_2, %c0_3] : memref<3x128xf32, #tpu.memory_space<vmem>>, vector<1x128xf32>
    %c1_i32 = arith.constant 1 : i32
    %8 = tpu.dynamic_rotate %6 by %c1_i32 dim 1 : vector<2x16x32xf32>, i32 -> vector<2x16x32xf32>
    %cst = arith.constant 0.000000e+00 : f32
    %9 = vector.shape_cast %2 : vector<2x16x1xi1> to vector<2x16x1xi1>
    %10 = vector.broadcast %9 : vector<2x16x1xi1> to vector<2x16x32xi1>
    %11 = vector.broadcast %cst : f32 to vector<2x16x32xf32>
    %12 = arith.select %10, %8, %11 : vector<2x16x32xi1>, vector<2x16x32xf32>
    %c15_i32_4 = arith.constant 15 : i32
    %13 = tpu.dynamic_rotate %6 by %c15_i32_4 dim 1 : vector<2x16x32xf32>, i32 -> vector<2x16x32xf32>
    %cst_5 = arith.constant 0.000000e+00 : f32
    %14 = vector.shape_cast %4 : vector<2x16x1xi1> to vector<2x16x1xi1>
    %15 = vector.broadcast %14 : vector<2x16x1xi1> to vector<2x16x32xi1>
    %16 = vector.broadcast %cst_5 : f32 to vector<2x16x32xf32>
    %17 = arith.select %15, %13, %16 : vector<2x16x32xi1>, vector<2x16x32xf32>
    %18 = vector.shape_cast %12 : vector<2x16x32xf32> to vector<32x32xf32>
    %19 = arith.truncf %18 : vector<32x32xf32> to vector<32x32xbf16>
    %c0_6 = arith.constant 0 : index
    %c0_7 = arith.constant 0 : index
    %c0_8 = arith.constant 0 : index
    %20 = vector.load %arg2[%c0_6, %c0_7, %c0_8] : memref<3x32x128xbf16, #tpu.memory_space<vmem>>, vector<1x32x128xbf16>
    %21 = vector.shape_cast %20 : vector<1x32x128xbf16> to vector<32x128xbf16>
    %cst_9 = arith.constant dense<0.000000e+00> : vector<32x128xf32>
    %22 = tpu.matmul %19, %21, %cst_9 {dimension_numbers = #tpu.dot_dimension_numbers<[1], [0], [0], [1], [0, 0, 1, 1], [], []>} : vector<32x32xbf16>, vector<32x128xbf16>, vector<32x128xf32> -> vector<32x128xf32>
    %23 = vector.shape_cast %6 : vector<2x16x32xf32> to vector<32x32xf32>
    %24 = arith.truncf %23 : vector<32x32xf32> to vector<32x32xbf16>
    %c1 = arith.constant 1 : index
    %c0_10 = arith.constant 0 : index
    %c0_11 = arith.constant 0 : index
    %25 = vector.load %arg2[%c1, %c0_10, %c0_11] : memref<3x32x128xbf16, #tpu.memory_space<vmem>>, vector<1x32x128xbf16>
    %26 = vector.shape_cast %25 : vector<1x32x128xbf16> to vector<32x128xbf16>
    %cst_12 = arith.constant dense<0.000000e+00> : vector<32x128xf32>
    %27 = tpu.matmul %24, %26, %cst_12 {dimension_numbers = #tpu.dot_dimension_numbers<[1], [0], [0], [1], [0, 0, 1, 1], [], []>} : vector<32x32xbf16>, vector<32x128xbf16>, vector<32x128xf32> -> vector<32x128xf32>
    %28 = arith.addf %22, %27 : vector<32x128xf32>
    %29 = vector.shape_cast %17 : vector<2x16x32xf32> to vector<32x32xf32>
    %30 = arith.truncf %29 : vector<32x32xf32> to vector<32x32xbf16>
    %c2 = arith.constant 2 : index
    %c0_13 = arith.constant 0 : index
    %c0_14 = arith.constant 0 : index
    %31 = vector.load %arg2[%c2, %c0_13, %c0_14] : memref<3x32x128xbf16, #tpu.memory_space<vmem>>, vector<1x32x128xbf16>
    %32 = vector.shape_cast %31 : vector<1x32x128xbf16> to vector<32x128xbf16>
    %cst_15 = arith.constant dense<0.000000e+00> : vector<32x128xf32>
    %33 = tpu.matmul %30, %32, %cst_15 {dimension_numbers = #tpu.dot_dimension_numbers<[1], [0], [0], [1], [0, 0, 1, 1], [], []>} : vector<32x32xbf16>, vector<32x128xbf16>, vector<32x128xf32> -> vector<32x128xf32>
    %34 = arith.addf %28, %33 : vector<32x128xf32>
    %35 = vector.broadcast %7 : vector<1x128xf32> to vector<32x128xf32>
    %36 = arith.addf %34, %35 : vector<32x128xf32>
    %cst_16 = arith.constant 0.000000e+00 : f32
    %37 = vector.broadcast %cst_16 : f32 to vector<32x128xf32>
    %38 = arith.maximumf %36, %37 : vector<32x128xf32>
    %39 = vector.shape_cast %38 : vector<32x128xf32> to vector<2x16x128xf32>
    %c1_17 = arith.constant 1 : index
    %c0_18 = arith.constant 0 : index
    %40 = vector.load %arg5[%c1_17, %c0_18] : memref<3x128xf32, #tpu.memory_space<vmem>>, vector<1x128xf32>
    %c1_i32_19 = arith.constant 1 : i32
    %41 = tpu.dynamic_rotate %39 by %c1_i32_19 dim 1 : vector<2x16x128xf32>, i32 -> vector<2x16x128xf32>
    %cst_20 = arith.constant 0.000000e+00 : f32
    %42 = vector.shape_cast %2 : vector<2x16x1xi1> to vector<2x16x1xi1>
    %43 = vector.broadcast %42 : vector<2x16x1xi1> to vector<2x16x128xi1>
    %44 = vector.broadcast %cst_20 : f32 to vector<2x16x128xf32>
    %45 = arith.select %43, %41, %44 : vector<2x16x128xi1>, vector<2x16x128xf32>
    %c15_i32_21 = arith.constant 15 : i32
    %46 = tpu.dynamic_rotate %39 by %c15_i32_21 dim 1 : vector<2x16x128xf32>, i32 -> vector<2x16x128xf32>
    %cst_22 = arith.constant 0.000000e+00 : f32
    %47 = vector.shape_cast %4 : vector<2x16x1xi1> to vector<2x16x1xi1>
    %48 = vector.broadcast %47 : vector<2x16x1xi1> to vector<2x16x128xi1>
    %49 = vector.broadcast %cst_22 : f32 to vector<2x16x128xf32>
    %50 = arith.select %48, %46, %49 : vector<2x16x128xi1>, vector<2x16x128xf32>
    %51 = vector.shape_cast %45 : vector<2x16x128xf32> to vector<32x128xf32>
    %52 = arith.truncf %51 : vector<32x128xf32> to vector<32x128xbf16>
    %c0_23 = arith.constant 0 : index
    %c0_24 = arith.constant 0 : index
    %c0_25 = arith.constant 0 : index
    %53 = vector.load %arg3[%c0_23, %c0_24, %c0_25] : memref<3x128x128xbf16, #tpu.memory_space<vmem>>, vector<1x128x128xbf16>
    %54 = vector.shape_cast %53 : vector<1x128x128xbf16> to vector<128x128xbf16>
    %cst_26 = arith.constant dense<0.000000e+00> : vector<32x128xf32>
    %55 = tpu.matmul %52, %54, %cst_26 {dimension_numbers = #tpu.dot_dimension_numbers<[1], [0], [0], [1], [0, 0, 1, 1], [], []>} : vector<32x128xbf16>, vector<128x128xbf16>, vector<32x128xf32> -> vector<32x128xf32>
    %56 = vector.shape_cast %39 : vector<2x16x128xf32> to vector<32x128xf32>
    %57 = arith.truncf %56 : vector<32x128xf32> to vector<32x128xbf16>
    %c1_27 = arith.constant 1 : index
    %c0_28 = arith.constant 0 : index
    %c0_29 = arith.constant 0 : index
    %58 = vector.load %arg3[%c1_27, %c0_28, %c0_29] : memref<3x128x128xbf16, #tpu.memory_space<vmem>>, vector<1x128x128xbf16>
    %59 = vector.shape_cast %58 : vector<1x128x128xbf16> to vector<128x128xbf16>
    %cst_30 = arith.constant dense<0.000000e+00> : vector<32x128xf32>
    %60 = tpu.matmul %57, %59, %cst_30 {dimension_numbers = #tpu.dot_dimension_numbers<[1], [0], [0], [1], [0, 0, 1, 1], [], []>} : vector<32x128xbf16>, vector<128x128xbf16>, vector<32x128xf32> -> vector<32x128xf32>
    %61 = arith.addf %55, %60 : vector<32x128xf32>
    %62 = vector.shape_cast %50 : vector<2x16x128xf32> to vector<32x128xf32>
    %63 = arith.truncf %62 : vector<32x128xf32> to vector<32x128xbf16>
    %c2_31 = arith.constant 2 : index
    %c0_32 = arith.constant 0 : index
    %c0_33 = arith.constant 0 : index
    %64 = vector.load %arg3[%c2_31, %c0_32, %c0_33] : memref<3x128x128xbf16, #tpu.memory_space<vmem>>, vector<1x128x128xbf16>
    %65 = vector.shape_cast %64 : vector<1x128x128xbf16> to vector<128x128xbf16>
    %cst_34 = arith.constant dense<0.000000e+00> : vector<32x128xf32>
    %66 = tpu.matmul %63, %65, %cst_34 {dimension_numbers = #tpu.dot_dimension_numbers<[1], [0], [0], [1], [0, 0, 1, 1], [], []>} : vector<32x128xbf16>, vector<128x128xbf16>, vector<32x128xf32> -> vector<32x128xf32>
    %67 = arith.addf %61, %66 : vector<32x128xf32>
    %68 = vector.broadcast %40 : vector<1x128xf32> to vector<32x128xf32>
    %69 = arith.addf %67, %68 : vector<32x128xf32>
    %cst_35 = arith.constant 0.000000e+00 : f32
    %70 = vector.broadcast %cst_35 : f32 to vector<32x128xf32>
    %71 = arith.maximumf %69, %70 : vector<32x128xf32>
    %72 = vector.shape_cast %71 : vector<32x128xf32> to vector<2x16x128xf32>
    %73 = arith.addf %39, %72 : vector<2x16x128xf32>
    %c2_36 = arith.constant 2 : index
    %c0_37 = arith.constant 0 : index
    %74 = vector.load %arg5[%c2_36, %c0_37] : memref<3x128xf32, #tpu.memory_space<vmem>>, vector<1x128xf32>
    %c1_i32_38 = arith.constant 1 : i32
    %75 = tpu.dynamic_rotate %73 by %c1_i32_38 dim 1 : vector<2x16x128xf32>, i32 -> vector<2x16x128xf32>
    %cst_39 = arith.constant 0.000000e+00 : f32
    %76 = vector.shape_cast %2 : vector<2x16x1xi1> to vector<2x16x1xi1>
    %77 = vector.broadcast %76 : vector<2x16x1xi1> to vector<2x16x128xi1>
    %78 = vector.broadcast %cst_39 : f32 to vector<2x16x128xf32>
    %79 = arith.select %77, %75, %78 : vector<2x16x128xi1>, vector<2x16x128xf32>
    %c15_i32_40 = arith.constant 15 : i32
    %80 = tpu.dynamic_rotate %73 by %c15_i32_40 dim 1 : vector<2x16x128xf32>, i32 -> vector<2x16x128xf32>
    %cst_41 = arith.constant 0.000000e+00 : f32
    %81 = vector.shape_cast %4 : vector<2x16x1xi1> to vector<2x16x1xi1>
    %82 = vector.broadcast %81 : vector<2x16x1xi1> to vector<2x16x128xi1>
    %83 = vector.broadcast %cst_41 : f32 to vector<2x16x128xf32>
    %84 = arith.select %82, %80, %83 : vector<2x16x128xi1>, vector<2x16x128xf32>
    %85 = vector.shape_cast %79 : vector<2x16x128xf32> to vector<32x128xf32>
    %86 = arith.truncf %85 : vector<32x128xf32> to vector<32x128xbf16>
    %c0_42 = arith.constant 0 : index
    %c0_43 = arith.constant 0 : index
    %c0_44 = arith.constant 0 : index
    %87 = vector.load %arg4[%c0_42, %c0_43, %c0_44] : memref<3x128x128xbf16, #tpu.memory_space<vmem>>, vector<1x128x128xbf16>
    %88 = vector.shape_cast %87 : vector<1x128x128xbf16> to vector<128x128xbf16>
    %cst_45 = arith.constant dense<0.000000e+00> : vector<32x128xf32>
    %89 = tpu.matmul %86, %88, %cst_45 {dimension_numbers = #tpu.dot_dimension_numbers<[1], [0], [0], [1], [0, 0, 1, 1], [], []>} : vector<32x128xbf16>, vector<128x128xbf16>, vector<32x128xf32> -> vector<32x128xf32>
    %90 = vector.shape_cast %73 : vector<2x16x128xf32> to vector<32x128xf32>
    %91 = arith.truncf %90 : vector<32x128xf32> to vector<32x128xbf16>
    %c1_46 = arith.constant 1 : index
    %c0_47 = arith.constant 0 : index
    %c0_48 = arith.constant 0 : index
    %92 = vector.load %arg4[%c1_46, %c0_47, %c0_48] : memref<3x128x128xbf16, #tpu.memory_space<vmem>>, vector<1x128x128xbf16>
    %93 = vector.shape_cast %92 : vector<1x128x128xbf16> to vector<128x128xbf16>
    %cst_49 = arith.constant dense<0.000000e+00> : vector<32x128xf32>
    %94 = tpu.matmul %91, %93, %cst_49 {dimension_numbers = #tpu.dot_dimension_numbers<[1], [0], [0], [1], [0, 0, 1, 1], [], []>} : vector<32x128xbf16>, vector<128x128xbf16>, vector<32x128xf32> -> vector<32x128xf32>
    %95 = arith.addf %89, %94 : vector<32x128xf32>
    %96 = vector.shape_cast %84 : vector<2x16x128xf32> to vector<32x128xf32>
    %97 = arith.truncf %96 : vector<32x128xf32> to vector<32x128xbf16>
    %c2_50 = arith.constant 2 : index
    %c0_51 = arith.constant 0 : index
    %c0_52 = arith.constant 0 : index
    %98 = vector.load %arg4[%c2_50, %c0_51, %c0_52] : memref<3x128x128xbf16, #tpu.memory_space<vmem>>, vector<1x128x128xbf16>
    %99 = vector.shape_cast %98 : vector<1x128x128xbf16> to vector<128x128xbf16>
    %cst_53 = arith.constant dense<0.000000e+00> : vector<32x128xf32>
    %100 = tpu.matmul %97, %99, %cst_53 {dimension_numbers = #tpu.dot_dimension_numbers<[1], [0], [0], [1], [0, 0, 1, 1], [], []>} : vector<32x128xbf16>, vector<128x128xbf16>, vector<32x128xf32> -> vector<32x128xf32>
    %101 = arith.addf %95, %100 : vector<32x128xf32>
    %102 = vector.broadcast %74 : vector<1x128xf32> to vector<32x128xf32>
    %103 = arith.addf %101, %102 : vector<32x128xf32>
    %cst_54 = arith.constant 0.000000e+00 : f32
    %104 = vector.broadcast %cst_54 : f32 to vector<32x128xf32>
    %105 = arith.maximumf %103, %104 : vector<32x128xf32>
    %106 = vector.shape_cast %105 : vector<32x128xf32> to vector<2x16x128xf32>
    %c0_55 = arith.constant 0 : index
    %c0_56 = arith.constant 0 : index
    %c0_57 = arith.constant 0 : index
    %107 = vector.load %arg6[%c0_55, %c0_56, %c0_57] : memref<2x16x128xf32, #tpu.memory_space<vmem>>, vector<2x16x128xf32>
    tpu.vector_store %arg6[%c0_55, %c0_56, %c0_57], %106 {strides = array<i32>} : memref<2x16x128xf32, #tpu.memory_space<vmem>>, vector<2x16x128xf32>,
    return
  }
  func.func @transform_0(%arg0: i32) -> (i32, i32, i32) {
    %c0_i32 = arith.constant 0 : i32
    %c0_i32_0 = arith.constant 0 : i32
    %c0_i32_1 = arith.constant 0 : i32
    return %arg0, %c0_i32, %c0_i32_0 : i32, i32, i32
  }
  func.func @transform_1(%arg0: i32) -> (i32, i32, i32) {
    %c0_i32 = arith.constant 0 : i32
    %c0_i32_0 = arith.constant 0 : i32
    %c0_i32_1 = arith.constant 0 : i32
    %c0_i32_2 = arith.constant 0 : i32
    return %c0_i32, %c0_i32_0, %c0_i32_1 : i32, i32, i32
  }
  func.func @transform_2(%arg0: i32) -> (i32, i32, i32) {
    %c0_i32 = arith.constant 0 : i32
    %c0_i32_0 = arith.constant 0 : i32
    %c0_i32_1 = arith.constant 0 : i32
    %c0_i32_2 = arith.constant 0 : i32
    return %c0_i32, %c0_i32_0, %c0_i32_1 : i32, i32, i32
  }
  func.func @transform_3(%arg0: i32) -> (i32, i32, i32) {
    %c0_i32 = arith.constant 0 : i32
    %c0_i32_0 = arith.constant 0 : i32
    %c0_i32_1 = arith.constant 0 : i32
    %c0_i32_2 = arith.constant 0 : i32
    return %c0_i32, %c0_i32_0, %c0_i32_1 : i32, i32, i32
  }
  func.func @transform_4(%arg0: i32) -> (i32, i32) {
    %c0_i32 = arith.constant 0 : i32
    %c0_i32_0 = arith.constant 0 : i32
    %c0_i32_1 = arith.constant 0 : i32
    return %c0_i32, %c0_i32_0 : i32, i32
  }
  func.func @transform_5(%arg0: i32) -> (i32, i32, i32) {
    %c0_i32 = arith.constant 0 : i32
    %c0_i32_0 = arith.constant 0 : i32
    %c0_i32_1 = arith.constant 0 : i32
    return %arg0, %c0_i32, %c0_i32_0 : i32, i32, i32
  }
}

</mosaic_0001>

<llo_original>
// kernel: tpu_custom_call.1
$region0: #{tpu_custom_call.1}
  #allocation0 [shape = 'u32[]', space=smem, size = 0x4, offset = 0x4, fixed_abs, tag = 'smem constant byte address 0x4 - core index']
  #allocation1 [shape = 'u32[72,128]{1,0:T(1,128)}', space=vmem, size = 0x9000, scoped, tag = 'internal scratch']
  %s0 = inlined_call_operand.hbm [shape: bf16[2,16,32], index: 0, kind: input, shape index: {}]
  %s1 = inlined_call_operand.hbm [shape: bf16[3,32,128], index: 1, kind: input, shape index: {}]
  %s2 = inlined_call_operand.hbm [shape: bf16[3,128,128], index: 2, kind: input, shape index: {}]
  %s3 = inlined_call_operand.hbm [shape: bf16[3,128,128], index: 3, kind: input, shape index: {}]
  %s4 = inlined_call_operand.hbm [shape: f32[3,128], index: 4, kind: input, shape index: {}]
  %s5 = inlined_call_operand.hbm [shape: f32[2,16,128], index: 5, kind: output, shape index: {}]
  %s6 = sld [smem:[#allocation0]]
  $region50: #{tpu_custom_call.1} parent=0
    _
  %s8 = ssub.s32 1, %s6
  %s9 = scalar_select 0, %s8, %s6
  $region1: #{tpu_custom_call.1} parent=0
    #allocation2 [shape = 'u8[8192]{0}', space=vmem, size = 0x2000, scoped, tag = 'input window, operand 0, single buffered']
    #allocation3 [shape = 's32[1]{0}', space=sflag, size = 0x4, scoped, tag = 'scoped memory for tpu_custom_call.1']
    #allocation4 [shape = 's32[1]{0}', space=sflag, size = 0x4, scoped, tag = 'scoped memory for tpu_custom_call.1']
    #allocation5 [shape = 'u8[24576]{0}', space=vmem, size = 0x6000, scoped, tag = 'input window, operand 1, single buffered']
    #allocation6 [shape = 's32[1]{0}', space=sflag, size = 0x4, scoped, tag = 'scoped memory for tpu_custom_call.1']
    #allocation7 [shape = 'u8[98304]{0}', space=vmem, size = 0x18000, scoped, tag = 'input window, operand 2, single buffered']
    #allocation8 [shape = 'u8[98304]{0}', space=vmem, size = 0x18000, scoped, tag = 'input window, operand 3, single buffered']
    #allocation9 [shape = 's32[1]{0}', space=sflag, size = 0x4, scoped, tag = 'scoped memory for tpu_custom_call.1']
    #allocation10 [shape = 'u8[2048]{0}', space=vmem, size = 0x800, scoped, tag = 'input window, operand 4, single buffered']
    #allocation11 [shape = 'u8[16384]{0}', space=vmem, size = 0x4000, scoped, tag = 'output window, operand 0, single buffered']
    %10 = vsyncpa [#allocation3], 0
    %11 = vsyncpa [#allocation6], 0
    %12 = vsyncpa [#allocation9], 0
    %13 = vsyncpa [#allocation4], 0
    // Predicated region
    $region2: #{tpu_custom_call.1} parent=1 // pred_check
      _
    $region3: #{tpu_custom_call.1} parent=1 // pred_check_branch
      %15 = sbr.rel (0) target = $region5
    $region4: #{tpu_custom_call.1} parent=1 // pred_region
      %17 = vsyncadd [#allocation3], 0
      %s18 = sshll.u32 %s0, 4
      %s19 = int_to_ptr.hbm [resolvable:$true] %s18
      %s20 = sshll.u32 [#allocation2], 4
      %s21 = int_to_ptr.vmem [resolvable:$true] %s20
      %26 = dma.hbm_to_vmem [thread:$0]  %s19, 256, %s21, [#allocation3], 64, 64, 4
    $region5: #{tpu_custom_call.1} parent=1 // pred_fallthru
      _
    // Predicated region
    $region6: #{tpu_custom_call.1} parent=1 // pred_check
      _
    $region7: #{tpu_custom_call.1} parent=1 // pred_check_branch
      %28 = sbr.rel (0) target = $region9
    $region8: #{tpu_custom_call.1} parent=1 // pred_region
      %30 = vsyncadd [#allocation6], 0
      %s31 = sshll.u32 %s1, 4
      %s32 = int_to_ptr.hbm [resolvable:$true] %s31
      %s33 = sshll.u32 [#allocation5], 4
      %s34 = int_to_ptr.vmem [resolvable:$true] %s33
      %39 = dma.hbm_to_vmem [thread:$0]  %s32, 768, %s34, [#allocation6], 64, 64, 4
    $region9: #{tpu_custom_call.1} parent=1 // pred_fallthru
      _
    // Predicated region
    $region10: #{tpu_custom_call.1} parent=1 // pred_check
      _
    $region11: #{tpu_custom_call.1} parent=1 // pred_check_branch
      %41 = sbr.rel (0) target = $region13
    $region12: #{tpu_custom_call.1} parent=1 // pred_region
      %43 = vsyncadd [#allocation6], 0
      %s44 = sshll.u32 %s2, 4
      %s45 = int_to_ptr.hbm [resolvable:$true] %s44
      %s46 = sshll.u32 [#allocation7], 4
      %s47 = int_to_ptr.vmem [resolvable:$true] %s46
      %52 = dma.hbm_to_vmem [thread:$0]  %s45, 3072, %s47, [#allocation6], 64, 64, 4
    $region13: #{tpu_custom_call.1} parent=1 // pred_fallthru
      _
    // Predicated region
    $region14: #{tpu_custom_call.1} parent=1 // pred_check
      _
    $region15: #{tpu_custom_call.1} parent=1 // pred_check_branch
      %54 = sbr.rel (0) target = $region17
    $region16: #{tpu_custom_call.1} parent=1 // pred_region
      %56 = vsyncadd [#allocation9], 0
      %s57 = sshll.u32 %s3, 4
      %s58 = int_to_ptr.hbm [resolvable:$true] %s57
      %s59 = sshll.u32 [#allocation8], 4
      %s60 = int_to_ptr.vmem [resolvable:$true] %s59
      %65 = dma.hbm_to_vmem [thread:$0]  %s58, 3072, %s60, [#allocation9], 64, 64, 4
    $region17: #{tpu_custom_call.1} parent=1 // pred_fallthru
      _
    // Predicated region
    $region18: #{tpu_custom_call.1} parent=1 // pred_check
      _
    $region19: #{tpu_custom_call.1} parent=1 // pred_check_branch
      %67 = sbr.rel (0) target = $region21
    $region20: #{tpu_custom_call.1} parent=1 // pred_region
      %69 = vsyncadd [#allocation9], 0
      %s71 = sshll.u32 %s4, 4
      %s72 = int_to_ptr.hbm [resolvable:$true] %s71
      %s73 = sshll.u32 [#allocation10], 4
      %s74 = int_to_ptr.vmem [resolvable:$true] %s73
      %76 = dma.hbm_to_vmem [thread:$0]  %s72, 64, %s74, [#allocation9]
    $region21: #{tpu_custom_call.1} parent=1 // pred_fallthru
      _
    // Predicated region
    $region22: #{tpu_custom_call.1} parent=1 // pred_check
      _
    $region23: #{tpu_custom_call.1} parent=1 // pred_check_branch
      %78 = sbr.rel (0) target = $region25
    $region24: #{tpu_custom_call.1} parent=1 // pred_region
      %80 = dma.done [#allocation3], 256
    $region25: #{tpu_custom_call.1} parent=1 // pred_fallthru
      _
    // Predicated region
    $region26: #{tpu_custom_call.1} parent=1 // pred_check
      _
    $region27: #{tpu_custom_call.1} parent=1 // pred_check_branch
      %82 = sbr.rel (0) target = $region29
    $region28: #{tpu_custom_call.1} parent=1 // pred_region
      %84 = dma.done [#allocation6], 768
    $region29: #{tpu_custom_call.1} parent=1 // pred_fallthru
      _
    // Predicated region
    $region30: #{tpu_custom_call.1} parent=1 // pred_check
      _
    $region31: #{tpu_custom_call.1} parent=1 // pred_check_branch
      %86 = sbr.rel (0) target = $region33
    $region32: #{tpu_custom_call.1} parent=1 // pred_region
      %88 = dma.done [#allocation6], 3072
    $region33: #{tpu_custom_call.1} parent=1 // pred_fallthru
      _
    // Predicated region
    $region34: #{tpu_custom_call.1} parent=1 // pred_check
      _
    $region35: #{tpu_custom_call.1} parent=1 // pred_check_branch
      %90 = sbr.rel (0) target = $region37
    $region36: #{tpu_custom_call.1} parent=1 // pred_region
      %92 = dma.done [#allocation9], 3072
    $region37: #{tpu_custom_call.1} parent=1 // pred_fallthru
      _
    // Predicated region
    $region38: #{tpu_custom_call.1} parent=1 // pred_check
      _
    $region39: #{tpu_custom_call.1} parent=1 // pred_check_branch
      %94 = sbr.rel (0) target = $region41
    $region40: #{tpu_custom_call.1} parent=1 // pred_region
      %96 = dma.done [#allocation9], 64
    $region41: #{tpu_custom_call.1} parent=1 // pred_fallthru
      _
    %v98 = vlaneseq
    %v99 = vshrl.u32 %v98, 7
    %v100 = vadd.s32 %v99, 8
    %vm101 = vcmp.ne.s32.totalorder %v99, 0
    %vm102 = vcmp.ne.s32.totalorder %v100, 0
    %vm103 = vcmp.ne.s32.totalorder %v99, 15
    %vm104 = vcmp.ne.s32.totalorder %v100, 15
    %v105 = vld [vmem:[#allocation2] sm:$0xf]
    %v106 = vld [vmem:[#allocation2 + $0x4] sm:$0xf]
    %v107 = vld [vmem:[#allocation2 + $0x8] sm:$0xf]
    %v108 = vld [vmem:[#allocation2 + $0xc] sm:$0xf]
    %v109 = vunpack.c.l.bf16 %v105
    %v110 = vunpack.c.l.bf16 %v106
    %v111 = vunpack.c.l.bf16 %v107
    %v112 = vunpack.c.l.bf16 %v108
    %v113 = vld [vmem:[#allocation10] sm:$0x1]
    %v114 = vrot.slane %v109, 7
    %v115 = vrot.slane %v111, 7
    %v116 = vrot.slane %v110, 7
    %v117 = vrot.slane %v112, 7
    %vm118 = vcmp.lt.s32.totalorder %v99, 1
    %v119 = vsel %vm118, %v114, %v116
    %v120 = vsel %vm118, %v115, %v117
    %v121 = vsel %vm118, %v116, %v114
    %v122 = vsel %vm118, %v117, %v115
    %v123 = vsel %vm101, 1, 0
    %v124 = vsel %vm102, 1, 0
    %vm125 = vcmp.eq.s32.totalorder %v123, 1
    %vm126 = vcmp.eq.s32.totalorder %v124, 1
    %v127 = vsel %vm125, %v121, 0.0
    %v128 = vsel %vm126, %v119, 0.0
    %v129 = vsel %vm125, %v122, 0.0
    %v130 = vsel %vm126, %v120, 0.0
    %v131 = vrot.slane %v109, 1
    %v132 = vrot.slane %v111, 1
    %v133 = vrot.slane %v110, 1
    %v134 = vrot.slane %v112, 1
    %vm135 = vcmp.lt.s32.totalorder %v99, 7
    %v136 = vsel %vm135, %v131, %v133
    %v137 = vsel %vm135, %v132, %v134
    %v138 = vsel %vm135, %v133, %v131
    %v139 = vsel %vm135, %v134, %v132
    %v140 = vsel %vm103, 1, 0
    %v141 = vsel %vm104, 1, 0
    %vm142 = vcmp.eq.s32.totalorder %v140, 1
    %vm143 = vcmp.eq.s32.totalorder %v141, 1
    %v144 = vsel %vm142, %v136, 0.0
    %v145 = vsel %vm143, %v138, 0.0
    %v146 = vsel %vm142, %v137, 0.0
    %v147 = vsel %vm143, %v139, 0.0
    %v148 = vpack.c.bf16 %v128, %v127
    %v149 = vpack.c.bf16 %v130, %v129
    %v150 = vld [vmem:[#allocation5] sm:$0xf]
    %v151 = vld [vmem:[#allocation5 + $0x4] sm:$0xf]
    %v152 = vld [vmem:[#allocation5 + $0x8] sm:$0xf]
    %v153 = vld [vmem:[#allocation5 + $0xc] sm:$0xf]
    %v154 = vpack.c.bf16 %v110, %v109
    %v155 = vpack.c.bf16 %v112, %v111
    %s156 = scalar_lea.vmem [#allocation5], 16
    %v157 = vld [vmem:[%s156] sm:$0xf]
    %v158 = vld [vmem:[%s156 + $0x4] sm:$0xf]
    %v159 = vld [vmem:[%s156 + $0x8] sm:$0xf]
    %v160 = vld [vmem:[%s156 + $0xc] sm:$0xf]
    %v165 = vunpack.c.l.b16 %v157
    %v166 = vunpack.c.l.b16 %v158
    %v167 = vunpack.c.l.b16 %v159
    %v168 = vunpack.c.l.b16 %v160
    %v169 = vpack.c.b16 %v166, %v165
    %v170 = vpack.c.b16 %v168, %v167
    %vm173 = vcmask 261120
    %v175 = vsel %vm173, %v154, 0
    %v178 = vsel %vm173, %v155, 0
    %180 = vmatpush.bf16.msra.mxu0 0
    %181 = vmatpush.bf16.msra.mxu0 0
    %182 = vmatpush.bf16.msra.mxu0 0
    %183 = vmatpush.bf16.msra.mxu0 0
    %184 = vmatpush.bf16.msra.mxu0 0
    %185 = vmatpush.bf16.msra.mxu0 0
    %186 = vmatpush.bf16.msra.mxu0 %v170
    %187 = vmatpush.bf16.msra.mxu0 %v169
    %188 = vmatmul.bf16.gmra.mxu0 %v175
    %v189 = vpop.f32.mrf.mxu0
    %v190 = vadd.f32 0.0, %v189
    %v191 = vpop.f32.mrf.mxu0
    %v192 = vadd.f32 0.0, %v191
    %193 = vmatmul.bf16.gmra.mxu0 %v178
    %v194 = vpop.f32.mrf.mxu0
    %v195 = vadd.f32 0.0, %v194
    %v196 = vpop.f32.mrf.mxu0
    %v197 = vadd.f32 0.0, %v196
    %198 = vdwg.mxu0
    %v203 = vunpack.c.l.b16 %v150
    %v204 = vunpack.c.l.b16 %v151
    %v205 = vunpack.c.l.b16 %v152
    %v206 = vunpack.c.l.b16 %v153
    %v207 = vpack.c.b16 %v204, %v203
    %v208 = vpack.c.b16 %v206, %v205
    %v212 = vsel %vm173, %v148, 0
    %v215 = vsel %vm173, %v149, 0
    %217 = vmatpush.bf16.msra.mxu0 0
    %218 = vmatpush.bf16.msra.mxu0 0
    %219 = vmatpush.bf16.msra.mxu0 0
    %220 = vmatpush.bf16.msra.mxu0 0
    %221 = vmatpush.bf16.msra.mxu0 0
    %222 = vmatpush.bf16.msra.mxu0 0
    %223 = vmatpush.bf16.msra.mxu0 %v208
    %224 = vmatpush.bf16.msra.mxu0 %v207
    %225 = vmatmul.bf16.gmra.mxu0 %v212
    %v226 = vpop.f32.mrf.mxu0
    %v227 = vadd.f32 %v190, %v226
    %v228 = vpop.f32.mrf.mxu0
    %v229 = vadd.f32 %v192, %v228
    %230 = vmatmul.bf16.gmra.mxu0 %v215
    %v231 = vpop.f32.mrf.mxu0
    %v232 = vadd.f32 %v195, %v231
    %v233 = vpop.f32.mrf.mxu0
    %v234 = vadd.f32 %v197, %v233
    %235 = vdwg.mxu0
    %v236 = vpack.c.bf16 %v145, %v144
    %v237 = vpack.c.bf16 %v147, %v146
    %s238 = scalar_lea.vmem [#allocation5], 32
    %v239 = vld [vmem:[%s238] sm:$0xf]
    %v240 = vld [vmem:[%s238 + $0x4] sm:$0xf]
    %v241 = vld [vmem:[%s238 + $0x8] sm:$0xf]
    %v242 = vld [vmem:[%s238 + $0xc] sm:$0xf]
    %v247 = vunpack.c.l.b16 %v239
    %v248 = vunpack.c.l.b16 %v240
    %v249 = vunpack.c.l.b16 %v241
    %v250 = vunpack.c.l.b16 %v242
    %v251 = vpack.c.b16 %v248, %v247
    %v252 = vpack.c.b16 %v250, %v249
    %v256 = vsel %vm173, %v236, 0
    %v259 = vsel %vm173, %v237, 0
    %261 = vmatpush.bf16.msra.mxu0 0
    %262 = vmatpush.bf16.msra.mxu0 0
    %263 = vmatpush.bf16.msra.mxu0 0
    %264 = vmatpush.bf16.msra.mxu0 0
    %265 = vmatpush.bf16.msra.mxu0 0
    %266 = vmatpush.bf16.msra.mxu0 0
    %267 = vmatpush.bf16.msra.mxu0 %v252
    %268 = vmatpush.bf16.msra.mxu0 %v251
    %269 = vmatmul.bf16.gmra.mxu0 %v256
    %v270 = vpop.f32.mrf.mxu0
    %v271 = vadd.f32 0.0, %v270
    %v272 = vpop.f32.mrf.mxu0
    %v273 = vadd.f32 0.0, %v272
    %274 = vmatmul.bf16.gmra.mxu0 %v259
    %v275 = vpop.f32.mrf.mxu0
    %v276 = vadd.f32 0.0, %v275
    %v277 = vpop.f32.mrf.mxu0
    %v278 = vadd.f32 0.0, %v277
    %279 = vdwg.mxu0
    %v280 = vadd.f32 %v227, %v271
    %v281 = vadd.f32 %v229, %v273
    %v282 = vadd.f32 %v232, %v276
    %v283 = vadd.f32 %v234, %v278
    %v284 = vperm.slane %v113, 0
    %v285 = vadd.f32 %v280, %v284
    %v286 = vadd.f32 %v281, %v284
    %v287 = vadd.f32 %v282, %v284
    %v288 = vadd.f32 %v283, %v284
    %v289 = vmax.f32 %v285, 0.0
    %v290 = vmax.f32 %v286, 0.0
    %v291 = vmax.f32 %v287, 0.0
    %v292 = vmax.f32 %v288, 0.0
    %v293 = vld [vmem:[#allocation10 + $0x1] sm:$0x1]
    %v294 = vrot.slane %v289, 7
    %v295 = vrot.slane %v291, 7
    %v296 = vrot.slane %v290, 7
    %v297 = vrot.slane %v292, 7
    %v298 = vsel %vm118, %v294, %v296
    %v299 = vsel %vm118, %v295, %v297
    %v300 = vsel %vm118, %v296, %v294
    %v301 = vsel %vm118, %v297, %v295
    %v302 = vsel %vm125, %v300, 0.0
    %v303 = vsel %vm126, %v298, 0.0
    %v304 = vsel %vm125, %v301, 0.0
    %v305 = vsel %vm126, %v299, 0.0
    %v306 = vrot.slane %v289, 1
    %v307 = vrot.slane %v291, 1
    %v308 = vrot.slane %v290, 1
    %v309 = vrot.slane %v292, 1
    %v310 = vsel %vm135, %v306, %v308
    %v311 = vsel %vm135, %v307, %v309
    %v312 = vsel %vm135, %v308, %v306
    %v313 = vsel %vm135, %v309, %v307
    %v314 = vsel %vm142, %v310, 0.0
    %v315 = vsel %vm143, %v312, 0.0
    %v316 = vsel %vm142, %v311, 0.0
    %v317 = vsel %vm143, %v313, 0.0
    %v318 = vpack.c.bf16 %v303, %v302
    %v319 = vpack.c.bf16 %v305, %v304
    %v320 = vld [vmem:[#allocation7] sm:$0xf]
    %v321 = vld [vmem:[#allocation7 + $0x4] sm:$0xf]
    %v322 = vld [vmem:[#allocation7 + $0x8] sm:$0xf]
    %v323 = vld [vmem:[#allocation7 + $0xc] sm:$0xf]
    %v324 = vld [vmem:[#allocation7 + $0x10] sm:$0xf]
    %v325 = vld [vmem:[#allocation7 + $0x14] sm:$0xf]
    %v326 = vld [vmem:[#allocation7 + $0x18] sm:$0xf]
    %v327 = vld [vmem:[#allocation7 + $0x1c] sm:$0xf]
    %v328 = vld [vmem:[#allocation7 + $0x20] sm:$0xf]
    %v329 = vld [vmem:[#allocation7 + $0x24] sm:$0xf]
    %v330 = vld [vmem:[#allocation7 + $0x28] sm:$0xf]
    %v331 = vld [vmem:[#allocation7 + $0x2c] sm:$0xf]
    %v332 = vld [vmem:[#allocation7 + $0x30] sm:$0xf]
    %v333 = vld [vmem:[#allocation7 + $0x34] sm:$0xf]
    %v334 = vld [vmem:[#allocation7 + $0x38] sm:$0xf]
    %v335 = vld [vmem:[#allocation7 + $0x3c] sm:$0xf]
    %v336 = vpack.c.bf16 %v290, %v289
    %v337 = vpack.c.bf16 %v292, %v291
    %s338 = scalar_lea.vmem [#allocation7], 64
    %v339 = vld [vmem:[%s338] sm:$0xf]
    %v340 = vld [vmem:[%s338 + $0x4] sm:$0xf]
    %v341 = vld [vmem:[%s338 + $0x8] sm:$0xf]
    %v342 = vld [vmem:[%s338 + $0xc] sm:$0xf]
    %v343 = vld [vmem:[%s338 + $0x10] sm:$0xf]
    %v344 = vld [vmem:[%s338 + $0x14] sm:$0xf]
    %v345 = vld [vmem:[%s338 + $0x18] sm:$0xf]
    %v346 = vld [vmem:[%s338 + $0x1c] sm:$0xf]
    %v347 = vld [vmem:[%s338 + $0x20] sm:$0xf]
    %v348 = vld [vmem:[%s338 + $0x24] sm:$0xf]
    %v349 = vld [vmem:[%s338 + $0x28] sm:$0xf]
    %v350 = vld [vmem:[%s338 + $0x2c] sm:$0xf]
    %v351 = vld [vmem:[%s338 + $0x30] sm:$0xf]
    %v352 = vld [vmem:[%s338 + $0x34] sm:$0xf]
    %v353 = vld [vmem:[%s338 + $0x38] sm:$0xf]
    %v354 = vld [vmem:[%s338 + $0x3c] sm:$0xf]
    %v371 = vunpack.c.l.b16 %v339
    %v372 = vunpack.c.l.b16 %v340
    %v373 = vunpack.c.l.b16 %v341
    %v374 = vunpack.c.l.b16 %v342
    %v375 = vunpack.c.l.b16 %v343
    %v376 = vunpack.c.l.b16 %v344
    %v377 = vunpack.c.l.b16 %v345
    %v378 = vunpack.c.l.b16 %v346
    %v379 = vunpack.c.l.b16 %v347
    %v380 = vunpack.c.l.b16 %v348
    %v381 = vunpack.c.l.b16 %v349
    %v382 = vunpack.c.l.b16 %v350
    %v383 = vunpack.c.l.b16 %v351
    %v384 = vunpack.c.l.b16 %v352
    %v385 = vunpack.c.l.b16 %v353
    %v386 = vunpack.c.l.b16 %v354
    %v387 = vpack.c.b16 %v372, %v371
    %v388 = vpack.c.b16 %v374, %v373
    %v389 = vpack.c.b16 %v376, %v375
    %v390 = vpack.c.b16 %v378, %v377
    %v391 = vpack.c.b16 %v380, %v379
    %v392 = vpack.c.b16 %v382, %v381
    %v393 = vpack.c.b16 %v384, %v383
    %v394 = vpack.c.b16 %v386, %v385
    %403 = vmatpush.bf16.msra.mxu0 %v394
    %404 = vmatpush.bf16.msra.mxu0 %v393
    %405 = vmatpush.bf16.msra.mxu0 %v392
    %406 = vmatpush.bf16.msra.mxu0 %v391
    %407 = vmatpush.bf16.msra.mxu0 %v390
    %408 = vmatpush.bf16.msra.mxu0 %v389
    %409 = vmatpush.bf16.msra.mxu0 %v388
    %410 = vmatpush.bf16.msra.mxu0 %v387
    %411 = vmatmul.bf16.gmra.mxu0 %v336
    %v412 = vpop.f32.mrf.mxu0
    %v413 = vadd.f32 0.0, %v412
    %v414 = vpop.f32.mrf.mxu0
    %v415 = vadd.f32 0.0, %v414
    %416 = vmatmul.bf16.gmra.mxu0 %v337
    %v417 = vpop.f32.mrf.mxu0
    %v418 = vadd.f32 0.0, %v417
    %v419 = vpop.f32.mrf.mxu0
    %v420 = vadd.f32 0.0, %v419
    %421 = vdwg.mxu0
    %v438 = vunpack.c.l.b16 %v320
    %v439 = vunpack.c.l.b16 %v321
    %v440 = vunpack.c.l.b16 %v322
    %v441 = vunpack.c.l.b16 %v323
    %v442 = vunpack.c.l.b16 %v324
    %v443 = vunpack.c.l.b16 %v325
    %v444 = vunpack.c.l.b16 %v326
    %v445 = vunpack.c.l.b16 %v327
    %v446 = vunpack.c.l.b16 %v328
    %v447 = vunpack.c.l.b16 %v329
    %v448 = vunpack.c.l.b16 %v330
    %v449 = vunpack.c.l.b16 %v331
    %v450 = vunpack.c.l.b16 %v332
    %v451 = vunpack.c.l.b16 %v333
    %v452 = vunpack.c.l.b16 %v334
    %v453 = vunpack.c.l.b16 %v335
    %v454 = vpack.c.b16 %v439, %v438
    %v455 = vpack.c.b16 %v441, %v440
    %v456 = vpack.c.b16 %v443, %v442
    %v457 = vpack.c.b16 %v445, %v444
    %v458 = vpack.c.b16 %v447, %v446
    %v459 = vpack.c.b16 %v449, %v448
    %v460 = vpack.c.b16 %v451, %v450
    %v461 = vpack.c.b16 %v453, %v452
    %470 = vmatpush.bf16.msra.mxu0 %v461
    %471 = vmatpush.bf16.msra.mxu0 %v460
    %472 = vmatpush.bf16.msra.mxu0 %v459
    %473 = vmatpush.bf16.msra.mxu0 %v458
    %474 = vmatpush.bf16.msra.mxu0 %v457
    %475 = vmatpush.bf16.msra.mxu0 %v456
    %476 = vmatpush.bf16.msra.mxu0 %v455
    %477 = vmatpush.bf16.msra.mxu0 %v454
    %478 = vmatmul.bf16.gmra.mxu0 %v318
    %v479 = vpop.f32.mrf.mxu0
    %v480 = vadd.f32 %v413, %v479
    %v481 = vpop.f32.mrf.mxu0
    %v482 = vadd.f32 %v415, %v481
    %483 = vmatmul.bf16.gmra.mxu0 %v319
    %v484 = vpop.f32.mrf.mxu0
    %v485 = vadd.f32 %v418, %v484
    %v486 = vpop.f32.mrf.mxu0
    %v487 = vadd.f32 %v420, %v486
    %488 = vdwg.mxu0
    %v489 = vpack.c.bf16 %v315, %v314
    %v490 = vpack.c.bf16 %v317, %v316
    %s491 = scalar_lea.vmem [#allocation7], 128
    %v492 = vld [vmem:[%s491] sm:$0xf]
    %v493 = vld [vmem:[%s491 + $0x4] sm:$0xf]
    %v494 = vld [vmem:[%s491 + $0x8] sm:$0xf]
    %v495 = vld [vmem:[%s491 + $0xc] sm:$0xf]
    %v496 = vld [vmem:[%s491 + $0x10] sm:$0xf]
    %v497 = vld [vmem:[%s491 + $0x14] sm:$0xf]
    %v498 = vld [vmem:[%s491 + $0x18] sm:$0xf]
    %v499 = vld [vmem:[%s491 + $0x1c] sm:$0xf]
    %v500 = vld [vmem:[%s491 + $0x20] sm:$0xf]
    %v501 = vld [vmem:[%s491 + $0x24] sm:$0xf]
    %v502 = vld [vmem:[%s491 + $0x28] sm:$0xf]
    %v503 = vld [vmem:[%s491 + $0x2c] sm:$0xf]
    %v504 = vld [vmem:[%s491 + $0x30] sm:$0xf]
    %v505 = vld [vmem:[%s491 + $0x34] sm:$0xf]
    %v506 = vld [vmem:[%s491 + $0x38] sm:$0xf]
    %v507 = vld [vmem:[%s491 + $0x3c] sm:$0xf]
    %v524 = vunpack.c.l.b16 %v492
    %v525 = vunpack.c.l.b16 %v493
    %v526 = vunpack.c.l.b16 %v494
    %v527 = vunpack.c.l.b16 %v495
    %v528 = vunpack.c.l.b16 %v496
    %v529 = vunpack.c.l.b16 %v497
    %v530 = vunpack.c.l.b16 %v498
    %v531 = vunpack.c.l.b16 %v499
    %v532 = vunpack.c.l.b16 %v500
    %v533 = vunpack.c.l.b16 %v501
    %v534 = vunpack.c.l.b16 %v502
    %v535 = vunpack.c.l.b16 %v503
    %v536 = vunpack.c.l.b16 %v504
    %v537 = vunpack.c.l.b16 %v505
    %v538 = vunpack.c.l.b16 %v506
    %v539 = vunpack.c.l.b16 %v507
    %v540 = vpack.c.b16 %v525, %v524
    %v541 = vpack.c.b16 %v527, %v526
    %v542 = vpack.c.b16 %v529, %v528
    %v543 = vpack.c.b16 %v531, %v530
    %v544 = vpack.c.b16 %v533, %v532
    %v545 = vpack.c.b16 %v535, %v534
    %v546 = vpack.c.b16 %v537, %v536
    %v547 = vpack.c.b16 %v539, %v538
    %556 = vmatpush.bf16.msra.mxu0 %v547
    %557 = vmatpush.bf16.msra.mxu0 %v546
    %558 = vmatpush.bf16.msra.mxu0 %v545
    %559 = vmatpush.bf16.msra.mxu0 %v544
    %560 = vmatpush.bf16.msra.mxu0 %v543
    %561 = vmatpush.bf16.msra.mxu0 %v542
    %562 = vmatpush.bf16.msra.mxu0 %v541
    %563 = vmatpush.bf16.msra.mxu0 %v540
    %564 = vmatmul.bf16.gmra.mxu0 %v489
    %v565 = vpop.f32.mrf.mxu0
    %v566 = vadd.f32 0.0, %v565
    %v567 = vpop.f32.mrf.mxu0
    %v568 = vadd.f32 0.0, %v567
    %569 = vmatmul.bf16.gmra.mxu0 %v490
    %v570 = vpop.f32.mrf.mxu0
    %v571 = vadd.f32 0.0, %v570
    %v572 = vpop.f32.mrf.mxu0
    %v573 = vadd.f32 0.0, %v572
    %574 = vdwg.mxu0
    %v575 = vadd.f32 %v480, %v566
    %v576 = vadd.f32 %v482, %v568
    %v577 = vadd.f32 %v485, %v571
    %v578 = vadd.f32 %v487, %v573
    %v579 = vperm.slane %v293, 0
    %v580 = vadd.f32 %v575, %v579
    %v581 = vadd.f32 %v576, %v579
    %v582 = vadd.f32 %v577, %v579
    %v583 = vadd.f32 %v578, %v579
    %v584 = vmax.f32 %v580, 0.0
    %v585 = vmax.f32 %v581, 0.0
    %v586 = vmax.f32 %v582, 0.0
    %v587 = vmax.f32 %v583, 0.0
    %v588 = vadd.f32 %v289, %v584
    %v589 = vadd.f32 %v290, %v585
    %v590 = vadd.f32 %v291, %v586
    %v591 = vadd.f32 %v292, %v587
    %v592 = vld [vmem:[#allocation10 + $0x2] sm:$0x1]
    %v593 = vrot.slane %v588, 7
    %v594 = vrot.slane %v590, 7
    %v595 = vrot.slane %v589, 7
    %v596 = vrot.slane %v591, 7
    %v597 = vsel %vm118, %v593, %v595
    %v598 = vsel %vm118, %v594, %v596
    %v599 = vsel %vm118, %v595, %v593
    %v600 = vsel %vm118, %v596, %v594
    %v601 = vsel %vm125, %v599, 0.0
    %v602 = vsel %vm126, %v597, 0.0
    %v603 = vsel %vm125, %v600, 0.0
    %v604 = vsel %vm126, %v598, 0.0
    %v605 = vrot.slane %v588, 1
    %v606 = vrot.slane %v590, 1
    %v607 = vrot.slane %v589, 1
    %v608 = vrot.slane %v591, 1
    %v609 = vsel %vm135, %v605, %v607
    %v610 = vsel %vm135, %v606, %v608
    %v611 = vsel %vm135, %v607, %v605
    %v612 = vsel %vm135, %v608, %v606
    %v613 = vsel %vm142, %v609, 0.0
    %v614 = vsel %vm143, %v611, 0.0
    %v615 = vsel %vm142, %v610, 0.0
    %v616 = vsel %vm143, %v612, 0.0
    %v617 = vpack.c.bf16 %v602, %v601
    %v618 = vpack.c.bf16 %v604, %v603
    %v619 = vld [vmem:[#allocation8] sm:$0xf]
    %v620 = vld [vmem:[#allocation8 + $0x4] sm:$0xf]
    %v621 = vld [vmem:[#allocation8 + $0x8] sm:$0xf]
    %v622 = vld [vmem:[#allocation8 + $0xc] sm:$0xf]
    %v623 = vld [vmem:[#allocation8 + $0x10] sm:$0xf]
    %v624 = vld [vmem:[#allocation8 + $0x14] sm:$0xf]
    %v625 = vld [vmem:[#allocation8 + $0x18] sm:$0xf]
    %v626 = vld [vmem:[#allocation8 + $0x1c] sm:$0xf]
    %v627 = vld [vmem:[#allocation8 + $0x20] sm:$0xf]
    %v628 = vld [vmem:[#allocation8 + $0x24] sm:$0xf]
    %v629 = vld [vmem:[#allocation8 + $0x28] sm:$0xf]
    %v630 = vld [vmem:[#allocation8 + $0x2c] sm:$0xf]
    %v631 = vld [vmem:[#allocation8 + $0x30] sm:$0xf]
    %v632 = vld [vmem:[#allocation8 + $0x34] sm:$0xf]
    %v633 = vld [vmem:[#allocation8 + $0x38] sm:$0xf]
    %v634 = vld [vmem:[#allocation8 + $0x3c] sm:$0xf]
    %v635 = vpack.c.bf16 %v589, %v588
    %v636 = vpack.c.bf16 %v591, %v590
    %s637 = scalar_lea.vmem [#allocation8], 64
    %v638 = vld [vmem:[%s637] sm:$0xf]
    %v639 = vld [vmem:[%s637 + $0x4] sm:$0xf]
    %v640 = vld [vmem:[%s637 + $0x8] sm:$0xf]
    %v641 = vld [vmem:[%s637 + $0xc] sm:$0xf]
    %v642 = vld [vmem:[%s637 + $0x10] sm:$0xf]
    %v643 = vld [vmem:[%s637 + $0x14] sm:$0xf]
    %v644 = vld [vmem:[%s637 + $0x18] sm:$0xf]
    %v645 = vld [vmem:[%s637 + $0x1c] sm:$0xf]
    %v646 = vld [vmem:[%s637 + $0x20] sm:$0xf]
    %v647 = vld [vmem:[%s637 + $0x24] sm:$0xf]
    %v648 = vld [vmem:[%s637 + $0x28] sm:$0xf]
    %v649 = vld [vmem:[%s637 + $0x2c] sm:$0xf]
    %v650 = vld [vmem:[%s637 + $0x30] sm:$0xf]
    %v651 = vld [vmem:[%s637 + $0x34] sm:$0xf]
    %v652 = vld [vmem:[%s637 + $0x38] sm:$0xf]
    %v653 = vld [vmem:[%s637 + $0x3c] sm:$0xf]
    %v670 = vunpack.c.l.b16 %v638
    %v671 = vunpack.c.l.b16 %v639
    %v672 = vunpack.c.l.b16 %v640
    %v673 = vunpack.c.l.b16 %v641
    %v674 = vunpack.c.l.b16 %v642
    %v675 = vunpack.c.l.b16 %v643
    %v676 = vunpack.c.l.b16 %v644
    %v677 = vunpack.c.l.b16 %v645
    %v678 = vunpack.c.l.b16 %v646
    %v679 = vunpack.c.l.b16 %v647
    %v680 = vunpack.c.l.b16 %v648
    %v681 = vunpack.c.l.b16 %v649
    %v682 = vunpack.c.l.b16 %v650
    %v683 = vunpack.c.l.b16 %v651
    %v684 = vunpack.c.l.b16 %v652
    %v685 = vunpack.c.l.b16 %v653
    %v686 = vpack.c.b16 %v671, %v670
    %v687 = vpack.c.b16 %v673, %v672
    %v688 = vpack.c.b16 %v675, %v674
    %v689 = vpack.c.b16 %v677, %v676
    %v690 = vpack.c.b16 %v679, %v678
    %v691 = vpack.c.b16 %v681, %v680
    %v692 = vpack.c.b16 %v683, %v682
    %v693 = vpack.c.b16 %v685, %v684
    %702 = vmatpush.bf16.msra.mxu0 %v693
    %703 = vmatpush.bf16.msra.mxu0 %v692
    %704 = vmatpush.bf16.msra.mxu0 %v691
    %705 = vmatpush.bf16.msra.mxu0 %v690
    %706 = vmatpush.bf16.msra.mxu0 %v689
    %707 = vmatpush.bf16.msra.mxu0 %v688
    %708 = vmatpush.bf16.msra.mxu0 %v687
    %709 = vmatpush.bf16.msra.mxu0 %v686
    %710 = vmatmul.bf16.gmra.mxu0 %v635
    %v711 = vpop.f32.mrf.mxu0
    %v712 = vadd.f32 0.0, %v711
    %v713 = vpop.f32.mrf.mxu0
    %v714 = vadd.f32 0.0, %v713
    %715 = vmatmul.bf16.gmra.mxu0 %v636
    %v716 = vpop.f32.mrf.mxu0
    %v717 = vadd.f32 0.0, %v716
    %v718 = vpop.f32.mrf.mxu0
    %v719 = vadd.f32 0.0, %v718
    %720 = vdwg.mxu0
    %v737 = vunpack.c.l.b16 %v619
    %v738 = vunpack.c.l.b16 %v620
    %v739 = vunpack.c.l.b16 %v621
    %v740 = vunpack.c.l.b16 %v622
    %v741 = vunpack.c.l.b16 %v623
    %v742 = vunpack.c.l.b16 %v624
    %v743 = vunpack.c.l.b16 %v625
    %v744 = vunpack.c.l.b16 %v626
    %v745 = vunpack.c.l.b16 %v627
    %v746 = vunpack.c.l.b16 %v628
    %v747 = vunpack.c.l.b16 %v629
    %v748 = vunpack.c.l.b16 %v630
    %v749 = vunpack.c.l.b16 %v631
    %v750 = vunpack.c.l.b16 %v632
    %v751 = vunpack.c.l.b16 %v633
    %v752 = vunpack.c.l.b16 %v634
    %v753 = vpack.c.b16 %v738, %v737
    %v754 = vpack.c.b16 %v740, %v739
    %v755 = vpack.c.b16 %v742, %v741
    %v756 = vpack.c.b16 %v744, %v743
    %v757 = vpack.c.b16 %v746, %v745
    %v758 = vpack.c.b16 %v748, %v747
    %v759 = vpack.c.b16 %v750, %v749
    %v760 = vpack.c.b16 %v752, %v751
    %769 = vmatpush.bf16.msra.mxu0 %v760
    %770 = vmatpush.bf16.msra.mxu0 %v759
    %771 = vmatpush.bf16.msra.mxu0 %v758
    %772 = vmatpush.bf16.msra.mxu0 %v757
    %773 = vmatpush.bf16.msra.mxu0 %v756
    %774 = vmatpush.bf16.msra.mxu0 %v755
    %775 = vmatpush.bf16.msra.mxu0 %v754
    %776 = vmatpush.bf16.msra.mxu0 %v753
    %777 = vmatmul.bf16.gmra.mxu0 %v617
    %v778 = vpop.f32.mrf.mxu0
    %v779 = vadd.f32 %v712, %v778
    %v780 = vpop.f32.mrf.mxu0
    %v781 = vadd.f32 %v714, %v780
    %782 = vmatmul.bf16.gmra.mxu0 %v618
    %v783 = vpop.f32.mrf.mxu0
    %v784 = vadd.f32 %v717, %v783
    %v785 = vpop.f32.mrf.mxu0
    %v786 = vadd.f32 %v719, %v785
    %787 = vdwg.mxu0
    %v788 = vpack.c.bf16 %v614, %v613
    %v789 = vpack.c.bf16 %v616, %v615
    %s790 = scalar_lea.vmem [#allocation8], 128
    %v791 = vld [vmem:[%s790] sm:$0xf]
    %v792 = vld [vmem:[%s790 + $0x4] sm:$0xf]
    %v793 = vld [vmem:[%s790 + $0x8] sm:$0xf]
    %v794 = vld [vmem:[%s790 + $0xc] sm:$0xf]
    %v795 = vld [vmem:[%s790 + $0x10] sm:$0xf]
    %v796 = vld [vmem:[%s790 + $0x14] sm:$0xf]
    %v797 = vld [vmem:[%s790 + $0x18] sm:$0xf]
    %v798 = vld [vmem:[%s790 + $0x1c] sm:$0xf]
    %v799 = vld [vmem:[%s790 + $0x20] sm:$0xf]
    %v800 = vld [vmem:[%s790 + $0x24] sm:$0xf]
    %v801 = vld [vmem:[%s790 + $0x28] sm:$0xf]
    %v802 = vld [vmem:[%s790 + $0x2c] sm:$0xf]
    %v803 = vld [vmem:[%s790 + $0x30] sm:$0xf]
    %v804 = vld [vmem:[%s790 + $0x34] sm:$0xf]
    %v805 = vld [vmem:[%s790 + $0x38] sm:$0xf]
    %v806 = vld [vmem:[%s790 + $0x3c] sm:$0xf]
    %v823 = vunpack.c.l.b16 %v791
    %v824 = vunpack.c.l.b16 %v792
    %v825 = vunpack.c.l.b16 %v793
    %v826 = vunpack.c.l.b16 %v794
    %v827 = vunpack.c.l.b16 %v795
    %v828 = vunpack.c.l.b16 %v796
    %v829 = vunpack.c.l.b16 %v797
    %v830 = vunpack.c.l.b16 %v798
    %v831 = vunpack.c.l.b16 %v799
    %v832 = vunpack.c.l.b16 %v800
    %v833 = vunpack.c.l.b16 %v801
    %v834 = vunpack.c.l.b16 %v802
    %v835 = vunpack.c.l.b16 %v803
    %v836 = vunpack.c.l.b16 %v804
    %v837 = vunpack.c.l.b16 %v805
    %v838 = vunpack.c.l.b16 %v806
    %v839 = vpack.c.b16 %v824, %v823
    %v840 = vpack.c.b16 %v826, %v825
    %v841 = vpack.c.b16 %v828, %v827
    %v842 = vpack.c.b16 %v830, %v829
    %v843 = vpack.c.b16 %v832, %v831
    %v844 = vpack.c.b16 %v834, %v833
    %v845 = vpack.c.b16 %v836, %v835
    %v846 = vpack.c.b16 %v838, %v837
    %855 = vmatpush.bf16.msra.mxu0 %v846
    %856 = vmatpush.bf16.msra.mxu0 %v845
    %857 = vmatpush.bf16.msra.mxu0 %v844
    %858 = vmatpush.bf16.msra.mxu0 %v843
    %859 = vmatpush.bf16.msra.mxu0 %v842
    %860 = vmatpush.bf16.msra.mxu0 %v841
    %861 = vmatpush.bf16.msra.mxu0 %v840
    %862 = vmatpush.bf16.msra.mxu0 %v839
    %863 = vmatmul.bf16.gmra.mxu0 %v788
    %v864 = vpop.f32.mrf.mxu0
    %v865 = vadd.f32 0.0, %v864
    %v866 = vpop.f32.mrf.mxu0
    %v867 = vadd.f32 0.0, %v866
    %868 = vmatmul.bf16.gmra.mxu0 %v789
    %v869 = vpop.f32.mrf.mxu0
    %v870 = vadd.f32 0.0, %v869
    %v871 = vpop.f32.mrf.mxu0
    %v872 = vadd.f32 0.0, %v871
    %873 = vdwg.mxu0
    %v874 = vadd.f32 %v779, %v865
    %v875 = vadd.f32 %v781, %v867
    %v876 = vadd.f32 %v784, %v870
    %v877 = vadd.f32 %v786, %v872
    %v878 = vperm.slane %v592, 0
    %v879 = vadd.f32 %v874, %v878
    %v880 = vadd.f32 %v875, %v878
    %v881 = vadd.f32 %v876, %v878
    %v882 = vadd.f32 %v877, %v878
    %v883 = vmax.f32 %v879, 0.0
    %v884 = vmax.f32 %v880, 0.0
    %v885 = vmax.f32 %v881, 0.0
    %v886 = vmax.f32 %v882, 0.0
    %887 = vst [vmem:[#allocation11] sm:$0xff] %v883
    %888 = vst [vmem:[#allocation11 + $0x8] sm:$0xff] %v884
    %889 = vst [vmem:[#allocation11 + $0x10] sm:$0xff] %v885
    %890 = vst [vmem:[#allocation11 + $0x18] sm:$0xff] %v886
    // Predicated region
    $region42: #{tpu_custom_call.1} parent=1 // pred_check
      _
    $region43: #{tpu_custom_call.1} parent=1 // pred_check_branch
      %892 = sbr.rel (0) target = $region45
    $region44: #{tpu_custom_call.1} parent=1 // pred_region
      %894 = vsyncadd [#allocation4], 0
      %s895 = sshll.u32 [#allocation11], 4
      %s896 = int_to_ptr.vmem [resolvable:$true] %s895
      %s897 = sshll.u32 %s5, 4
      %s898 = int_to_ptr.hbm [resolvable:$true] %s897
      %903 = dma.vmem_to_hbm [thread:$0]  %s896, 512, %s898, [#allocation4], 128, 128, 8
    $region45: #{tpu_custom_call.1} parent=1 // pred_fallthru
      _
    // Predicated region
    $region46: #{tpu_custom_call.1} parent=1 // pred_check
      _
    $region47: #{tpu_custom_call.1} parent=1 // pred_check_branch
      %905 = sbr.rel (0) target = $region49
    $region48: #{tpu_custom_call.1} parent=1 // pred_region
      %907 = dma.done [#allocation4], 512
    $region49: #{tpu_custom_call.1} parent=1 // pred_fallthru
      _
    %908 = vsyncpa [#allocation3], 1
    %909 = vsyncpa [#allocation6], 1
    %910 = vsyncpa [#allocation9], 1
    %911 = vsyncpa [#allocation4], 1

</llo_original>
